<compile_context>
chip_gen: v5e
topology: v5e:2x2
jax: 0.10.0
libtpu: 0.0.40
codegen_flags: <defaults>
</compile_context>

<pallas_src>
import functools

import jax
import jax.numpy as jnp
from jax.experimental import pallas as pl
from jax.experimental.pallas import tpu as pltpu

_LANE = 128


def _round_up(x, m):
    return (x + m - 1) // m * m


def _graph_embedding2_kernel(adj_ref, h_ref,
                             w1_ref, b1_ref,
                             w2_ref, b2_ref,
                             w3_ref, b3_ref,
                             out_ref, *, gb, n):
    # adj_ref: (Gb, N, N) bf16 (0/1)   h_ref: (Gb, N, Din_p) bf16
    # w*_ref:  bf16 padded             b*_ref: (1, D_p) f32
    A = adj_ref[...]                                        # (Gb, N, N) bf16

    # GraphConv norm='both' normalization. Degree sums accumulate in f32 (exact for
    # 0/1 entries); clamp to >= 1 matches DGL's degs.clamp(min=1) with
    # allow_zero_in_degree=True.
    in_deg = jnp.sum(A, axis=2, keepdims=True, dtype=jnp.float32)   # (Gb, N, 1) dst
    out_deg = jnp.sum(A, axis=1, keepdims=True, dtype=jnp.float32)  # (Gb, 1, N) src
    norm_dst = jax.lax.rsqrt(jnp.maximum(in_deg, 1.0))
    norm_src = jax.lax.rsqrt(jnp.maximum(out_deg, 1.0))
    A_hat = (A * norm_dst * norm_src).astype(jnp.bfloat16)          # (Gb, N, N) bf16

    def gconv_relu(x_bf16, w_ref, b_ref):
        """relu(A_hat @ x @ W + b); matmuls in bf16 with f32 accumulation."""
        din = x_bf16.shape[-1]
        dout = w_ref.shape[-1]
        w = w_ref[...]
        if dout <= din:
            # Shrink features first: one flattened (Gb*N, din) @ (din, dout) matmul,
            # then the NxN aggregation runs on the narrower width.
            xw = jnp.dot(x_bf16.reshape(gb * n, din), w,
                         preferred_element_type=jnp.float32)
            xw = xw.astype(jnp.bfloat16).reshape(gb, n, dout)
            agg = jnp.einsum('gnm,gmd->gnd', A_hat, xw,
                             preferred_element_type=jnp.float32)
        else:
            # Aggregate first on the narrower input width, then expand.
            ax = jnp.einsum('gnm,gmd->gnd', A_hat, x_bf16,
                            preferred_element_type=jnp.float32)
            ax = ax.astype(jnp.bfloat16).reshape(gb * n, din)
            agg = jnp.dot(ax, w,
                          preferred_element_type=jnp.float32).reshape(gb, n, dout)
        return jnp.maximum(agg + b_ref[...], 0.0)           # f32 (Gb, N, dout)

    h1 = gconv_relu(h_ref[...], w1_ref, b1_ref).astype(jnp.bfloat16)
    h2 = gconv_relu(h1, w2_ref, b2_ref).astype(jnp.bfloat16)
    h3 = gconv_relu(h2, w3_ref, b3_ref)                     # f32

    # dgl.mean_nodes: per-graph mean over nodes -> one lane-dense (Gb, out_p) store.
    out_ref[...] = jnp.mean(h3, axis=1)


def graph_embedding2(adj, h, params):
    """adj: (G, N, N) f32 with adj[g, dst, src]=1 per edge; h: (G, N, in_dim) f32.
    Returns (G, out_dim) f32."""
    G, N, _ = adj.shape
    in_dim = h.shape[-1]
    w1, b1, w2, b2, w3, b3 = params
    hid = w1.shape[1]
    out_dim = w3.shape[1]

    # ---- pad feature dims to 128-lane multiples (zero padding is exact) ----
    din_p = _round_up(in_dim, _LANE)
    hid_p = _round_up(hid, _LANE)
    out_p = _round_up(out_dim, _LANE)

    def pad2(x, r, c):
        return jnp.pad(x, ((0, r - x.shape[0]), (0, c - x.shape[1])))

    # 0/1 adjacency is exactly representable in bf16 -> halves HBM traffic.
    adj_bf = adj.astype(jnp.bfloat16)
    h_p = jnp.pad(h, ((0, 0), (0, 0), (0, din_p - in_dim))).astype(jnp.bfloat16)
    w1_p = pad2(w1, din_p, hid_p).astype(jnp.bfloat16)
    w2_p = pad2(w2, hid_p, hid_p).astype(jnp.bfloat16)
    w3_p = pad2(w3, hid_p, out_p).astype(jnp.bfloat16)
    b1_p = pad2(b1.reshape(1, -1).astype(jnp.float32), 1, hid_p)
    b2_p = pad2(b2.reshape(1, -1).astype(jnp.float32), 1, hid_p)
    b3_p = pad2(b3.reshape(1, -1).astype(jnp.float32), 1, out_p)

    # ---- VMEM budget (per-chip-generation) and graphs-per-block choice ----
    try:
        vmem_cap = pltpu.get_tpu_info().vmem_capacity_bytes   # 128 MiB v5e/v6e, 64 MiB v7x
    except Exception:
        vmem_cap = 64 << 20                                   # conservative fallback
    vmem_budget = (vmem_cap * 3) // 4                         # leave compiler headroom

    per_graph = (2 * N * N * 2                 # adjacency block, bf16, double-buffered
                 + N * N * (4 + 2)             # A_hat intermediate (f32 + bf16 temps)
                 + 2 * N * din_p * 2           # feature block, bf16, double-buffered
                 + N * (hid_p * 6 + out_p * 4 + din_p * 2)    # layer intermediates
                 + 2 * out_p * 4)              # output block
    weights_bytes = 2 * (2 * ((din_p + hid_p) * hid_p + hid_p * out_p)
                         + (2 * hid_p + out_p) * 4)
    gb = max(1, min(G, (vmem_budget - weights_bytes) // max(per_graph, 1)))
    # prefer >= 2 grid steps (megacore / pipelining) when each block still fills MXU rows
    if gb == G and G >= 2 and (G // 2) * N >= 256:
        gb = G // 2
    # gb must divide G; and as the sublane dim of the output block it should be
    # either the full G or a multiple of 8 (lane/sublane tiling), else 1.
    while gb > 1 and not (G % gb == 0 and (gb == G or gb % 8 == 0)):
        gb -= 1

    kernel = functools.partial(_graph_embedding2_kernel, gb=gb, n=N)

    out_padded = pl.pallas_call(
        kernel,
        out_shape=jax.ShapeDtypeStruct((G, out_p), jnp.float32),
        grid_spec=pltpu.PrefetchScalarGridSpec(
            num_scalar_prefetch=0,
            grid=(G // gb,),
            in_specs=[
                pl.BlockSpec((gb, N, N), lambda g: (g, 0, 0)),        # adjacency
                pl.BlockSpec((gb, N, din_p), lambda g: (g, 0, 0)),    # node features
                pl.BlockSpec((din_p, hid_p), lambda g: (0, 0)),       # W1
                pl.BlockSpec((1, hid_p), lambda g: (0, 0)),           # b1
                pl.BlockSpec((hid_p, hid_p), lambda g: (0, 0)),       # W2
                pl.BlockSpec((1, hid_p), lambda g: (0, 0)),           # b2
                pl.BlockSpec((hid_p, out_p), lambda g: (0, 0)),       # W3
                pl.BlockSpec((1, out_p), lambda g: (0, 0)),           # b3
            ],
            out_specs=pl.BlockSpec((gb, out_p), lambda g: (g, 0)),
        ),
        compiler_params=pltpu.CompilerParams(
            dimension_semantics=("parallel",),
            vmem_limit_bytes=int(vmem_budget)),
    )(adj_bf, h_p, w1_p, b1_p, w2_p, b2_p, w3_p, b3_p)

    return out_padded[:, :out_dim]


def _reference(adj, h, params):
    """Pure-JAX f32 reference of the same math (sanity check)."""
    w1, b1, w2, b2, w3, b3 = params
    in_deg = jnp.sum(adj, axis=2, keepdims=True)
    out_deg = jnp.sum(adj, axis=1, keepdims=True)
    a_hat = adj * jax.lax.rsqrt(jnp.maximum(in_deg, 1.0)) \
                * jax.lax.rsqrt(jnp.maximum(out_deg, 1.0))

    def layer(x, w, b):
        return jnp.maximum(jnp.einsum("gnm,gmd->gnd", a_hat, x @ w) + b.reshape(1, 1, -1), 0.0)

    x = layer(h, w1, b1)
    x = layer(x, w2, b2)
    x = layer(x, w3, b3)
    return jnp.mean(x, axis=1)


if __name__ == "__main__":
    G, N = 2, 8                  # 2 graphs, 8 nodes each
    in_dim, hidden_dim, out_dim = 16, 32, 16

    key = jax.random.PRNGKey(0)
    k_adj, k_h, k1, k2, k3, kb1, kb2, kb3 = jax.random.split(key, 8)

    # Deterministic random directed graphs (dense adjacency).
    adj = (jax.random.uniform(k_adj, (G, N, N)) < 0.3).astype(jnp.float32)
    h = jax.random.normal(k_h, (G, N, in_dim), dtype=jnp.float32)

    def init_w(k, shape):
        return jax.random.normal(k, shape, dtype=jnp.float32) * 0.1

    params = (
        init_w(k1, (in_dim, hidden_dim)), init_w(kb1, (hidden_dim,)),
        init_w(k2, (hidden_dim, hidden_dim)), init_w(kb2, (hidden_dim,)),
        init_w(k3, (hidden_dim, out_dim)), init_w(kb3, (out_dim,)),
    )

    out = graph_embedding2(adj, h, params)
    out = jax.block_until_ready(out)

    ref = _reference(adj, h, params)
    assert out.shape == (G, out_dim)
    # bf16 matmul operands with f32 accumulation -> loosened tolerance vs f32 reference.
    assert jnp.allclose(out, ref, atol=1e-2, rtol=5e-2), float(jnp.max(jnp.abs(out - ref)))

    print("KERNEL_OK")
</pallas_src>

<mosaic_0001>
module attributes {stable_mosaic.version = 11 : i64} {
  func.func @_graph_embedding2_kernel(%arg0: i32, %arg1: memref<2x8x8xbf16, #tpu.memory_space<vmem>>, %arg2: memref<2x8x128xbf16, #tpu.memory_space<vmem>>, %arg3: memref<128x128xbf16, #tpu.memory_space<vmem>>, %arg4: memref<1x128xf32, #tpu.memory_space<vmem>>, %arg5: memref<128x128xbf16, #tpu.memory_space<vmem>>, %arg6: memref<1x128xf32, #tpu.memory_space<vmem>>, %arg7: memref<128x128xbf16, #tpu.memory_space<vmem>>, %arg8: memref<1x128xf32, #tpu.memory_space<vmem>>, %arg9: memref<2x128xf32, #tpu.memory_space<vmem>>) attributes {dimension_semantics = [#tpu.dimension_semantics<parallel>], iteration_bounds = array<i64: 1>, scalar_prefetch = 0 : i64, scratch_operands = 0 : i64, tpu.core_type = #tpu.core_type<tc>, window_params = [{transform_indices = @transform_0, window_bounds = array<i64: 2, 8, 8>}, {transform_indices = @transform_1, window_bounds = array<i64: 2, 8, 128>}, {pipeline_mode = #tpu.pipeline_mode<synchronous>, transform_indices = @transform_2, window_bounds = array<i64: 128, 128>}, {pipeline_mode = #tpu.pipeline_mode<synchronous>, transform_indices = @transform_3, window_bounds = array<i64: 1, 128>}, {pipeline_mode = #tpu.pipeline_mode<synchronous>, transform_indices = @transform_4, window_bounds = array<i64: 128, 128>}, {pipeline_mode = #tpu.pipeline_mode<synchronous>, transform_indices = @transform_5, window_bounds = array<i64: 1, 128>}, {pipeline_mode = #tpu.pipeline_mode<synchronous>, transform_indices = @transform_6, window_bounds = array<i64: 128, 128>}, {pipeline_mode = #tpu.pipeline_mode<synchronous>, transform_indices = @transform_7, window_bounds = array<i64: 1, 128>}, {transform_indices = @transform_8, window_bounds = array<i64: 2, 128>}]} {
    %c0 = arith.constant 0 : index
    %c0_0 = arith.constant 0 : index
    %c0_1 = arith.constant 0 : index
    %0 = vector.load %arg1[%c0, %c0_0, %c0_1] : memref<2x8x8xbf16, #tpu.memory_space<vmem>>, vector<2x8x8xbf16>
    %1 = arith.extf %0 : vector<2x8x8xbf16> to vector<2x8x8xf32>
    %cst = arith.constant dense<0.000000e+00> : vector<2x8xf32>
    %2 = vector.multi_reduction <add>, %1, %cst [2] : vector<2x8x8xf32> to vector<2x8xf32>
    %3 = vector.shape_cast %2 : vector<2x8xf32> to vector<2x8x1xf32>
    %4 = arith.extf %0 : vector<2x8x8xbf16> to vector<2x8x8xf32>
    %cst_2 = arith.constant dense<0.000000e+00> : vector<2x8xf32>
    %5 = vector.multi_reduction <add>, %4, %cst_2 [1] : vector<2x8x8xf32> to vector<2x8xf32>
    %6 = vector.shape_cast %5 : vector<2x8xf32> to vector<2x1x8xf32>
    %cst_3 = arith.constant 1.000000e+00 : f32
    %7 = vector.broadcast %cst_3 : f32 to vector<2x8x1xf32>
    %8 = arith.maximumf %3, %7 : vector<2x8x1xf32>
    %9 = math.rsqrt %8 : vector<2x8x1xf32>
    %cst_4 = arith.constant 1.000000e+00 : f32
    %10 = vector.broadcast %cst_4 : f32 to vector<2x1x8xf32>
    %11 = arith.maximumf %6, %10 : vector<2x1x8xf32>
    %12 = math.rsqrt %11 : vector<2x1x8xf32>
    %13 = arith.extf %0 : vector<2x8x8xbf16> to vector<2x8x8xf32>
    %14 = vector.broadcast %9 : vector<2x8x1xf32> to vector<2x8x8xf32>
    %15 = arith.mulf %13, %14 : vector<2x8x8xf32>
    %16 = vector.broadcast %12 : vector<2x1x8xf32> to vector<2x8x8xf32>
    %17 = arith.mulf %15, %16 : vector<2x8x8xf32>
    %18 = arith.truncf %17 : vector<2x8x8xf32> to vector<2x8x8xbf16>
    %c0_5 = arith.constant 0 : index
    %c0_6 = arith.constant 0 : index
    %c0_7 = arith.constant 0 : index
    %19 = vector.load %arg2[%c0_5, %c0_6, %c0_7] : memref<2x8x128xbf16, #tpu.memory_space<vmem>>, vector<2x8x128xbf16>
    %c0_8 = arith.constant 0 : index
    %c0_9 = arith.constant 0 : index
    %20 = vector.load %arg3[%c0_8, %c0_9] : memref<128x128xbf16, #tpu.memory_space<vmem>>, vector<128x128xbf16>
    %21 = vector.shape_cast %19 : vector<2x8x128xbf16> to vector<16x128xbf16>
    %cst_10 = arith.constant dense<0.000000e+00> : vector<16x128xf32>
    %22 = tpu.matmul %21, %20, %cst_10 {dimension_numbers = #tpu.dot_dimension_numbers<[1], [0], [0], [1], [0, 0, 1, 1], [], []>} : vector<16x128xbf16>, vector<128x128xbf16>, vector<16x128xf32> -> vector<16x128xf32>
    %23 = arith.truncf %22 : vector<16x128xf32> to vector<16x128xbf16>
    %24 = vector.shape_cast %23 : vector<16x128xbf16> to vector<2x8x128xbf16>
    "tpu.trace_start"() <{level = 10 : i32, message = "gnm,gmd->gnd"}> : () -> ()
    %cst_11 = arith.constant dense<0.000000e+00> : vector<2x8x128xf32>
    %25 = tpu.matmul %18, %24, %cst_11 {dimension_numbers = #tpu.dot_dimension_numbers<[2], [1], [1], [2], [0, 0, 0, 1, 1, 2], [0], [0]>} : vector<2x8x8xbf16>, vector<2x8x128xbf16>, vector<2x8x128xf32> -> vector<2x8x128xf32>
    "tpu.trace_stop"() : () -> ()
    %c0_12 = arith.constant 0 : index
    %c0_13 = arith.constant 0 : index
    %26 = vector.load %arg4[%c0_12, %c0_13] : memref<1x128xf32, #tpu.memory_space<vmem>>, vector<1x128xf32>
    %27 = vector.shape_cast %26 : vector<1x128xf32> to vector<1x1x128xf32>
    %28 = vector.broadcast %27 : vector<1x1x128xf32> to vector<2x8x128xf32>
    %29 = arith.addf %25, %28 : vector<2x8x128xf32>
    %cst_14 = arith.constant 0.000000e+00 : f32
    %30 = vector.broadcast %cst_14 : f32 to vector<2x8x128xf32>
    %31 = arith.maximumf %29, %30 : vector<2x8x128xf32>
    %32 = arith.truncf %31 : vector<2x8x128xf32> to vector<2x8x128xbf16>
    %c0_15 = arith.constant 0 : index
    %c0_16 = arith.constant 0 : index
    %33 = vector.load %arg5[%c0_15, %c0_16] : memref<128x128xbf16, #tpu.memory_space<vmem>>, vector<128x128xbf16>
    %34 = vector.shape_cast %32 : vector<2x8x128xbf16> to vector<16x128xbf16>
    %cst_17 = arith.constant dense<0.000000e+00> : vector<16x128xf32>
    %35 = tpu.matmul %34, %33, %cst_17 {dimension_numbers = #tpu.dot_dimension_numbers<[1], [0], [0], [1], [0, 0, 1, 1], [], []>} : vector<16x128xbf16>, vector<128x128xbf16>, vector<16x128xf32> -> vector<16x128xf32>
    %36 = arith.truncf %35 : vector<16x128xf32> to vector<16x128xbf16>
    %37 = vector.shape_cast %36 : vector<16x128xbf16> to vector<2x8x128xbf16>
    "tpu.trace_start"() <{level = 10 : i32, message = "gnm,gmd->gnd"}> : () -> ()
    %cst_18 = arith.constant dense<0.000000e+00> : vector<2x8x128xf32>
    %38 = tpu.matmul %18, %37, %cst_18 {dimension_numbers = #tpu.dot_dimension_numbers<[2], [1], [1], [2], [0, 0, 0, 1, 1, 2], [0], [0]>} : vector<2x8x8xbf16>, vector<2x8x128xbf16>, vector<2x8x128xf32> -> vector<2x8x128xf32>
    "tpu.trace_stop"() : () -> ()
    %c0_19 = arith.constant 0 : index
    %c0_20 = arith.constant 0 : index
    %39 = vector.load %arg6[%c0_19, %c0_20] : memref<1x128xf32, #tpu.memory_space<vmem>>, vector<1x128xf32>
    %40 = vector.shape_cast %39 : vector<1x128xf32> to vector<1x1x128xf32>
    %41 = vector.broadcast %40 : vector<1x1x128xf32> to vector<2x8x128xf32>
    %42 = arith.addf %38, %41 : vector<2x8x128xf32>
    %cst_21 = arith.constant 0.000000e+00 : f32
    %43 = vector.broadcast %cst_21 : f32 to vector<2x8x128xf32>
    %44 = arith.maximumf %42, %43 : vector<2x8x128xf32>
    %45 = arith.truncf %44 : vector<2x8x128xf32> to vector<2x8x128xbf16>
    %c0_22 = arith.constant 0 : index
    %c0_23 = arith.constant 0 : index
    %46 = vector.load %arg7[%c0_22, %c0_23] : memref<128x128xbf16, #tpu.memory_space<vmem>>, vector<128x128xbf16>
    %47 = vector.shape_cast %45 : vector<2x8x128xbf16> to vector<16x128xbf16>
    %cst_24 = arith.constant dense<0.000000e+00> : vector<16x128xf32>
    %48 = tpu.matmul %47, %46, %cst_24 {dimension_numbers = #tpu.dot_dimension_numbers<[1], [0], [0], [1], [0, 0, 1, 1], [], []>} : vector<16x128xbf16>, vector<128x128xbf16>, vector<16x128xf32> -> vector<16x128xf32>
    %49 = arith.truncf %48 : vector<16x128xf32> to vector<16x128xbf16>
    %50 = vector.shape_cast %49 : vector<16x128xbf16> to vector<2x8x128xbf16>
    "tpu.trace_start"() <{level = 10 : i32, message = "gnm,gmd->gnd"}> : () -> ()
    %cst_25 = arith.constant dense<0.000000e+00> : vector<2x8x128xf32>
    %51 = tpu.matmul %18, %50, %cst_25 {dimension_numbers = #tpu.dot_dimension_numbers<[2], [1], [1], [2], [0, 0, 0, 1, 1, 2], [0], [0]>} : vector<2x8x8xbf16>, vector<2x8x128xbf16>, vector<2x8x128xf32> -> vector<2x8x128xf32>
    "tpu.trace_stop"() : () -> ()
    %c0_26 = arith.constant 0 : index
    %c0_27 = arith.constant 0 : index
    %52 = vector.load %arg8[%c0_26, %c0_27] : memref<1x128xf32, #tpu.memory_space<vmem>>, vector<1x128xf32>
    %53 = vector.shape_cast %52 : vector<1x128xf32> to vector<1x1x128xf32>
    %54 = vector.broadcast %53 : vector<1x1x128xf32> to vector<2x8x128xf32>
    %55 = arith.addf %51, %54 : vector<2x8x128xf32>
    %cst_28 = arith.constant 0.000000e+00 : f32
    %56 = vector.broadcast %cst_28 : f32 to vector<2x8x128xf32>
    %57 = arith.maximumf %55, %56 : vector<2x8x128xf32>
    %cst_29 = arith.constant dense<0.000000e+00> : vector<2x128xf32>
    %58 = vector.multi_reduction <add>, %57, %cst_29 [1] : vector<2x8x128xf32> to vector<2x128xf32>
    %cst_30 = arith.constant 8.000000e+00 : f32
    %59 = vector.broadcast %cst_30 : f32 to vector<2x128xf32>
    %60 = arith.divf %58, %59 : vector<2x128xf32>
    %c0_31 = arith.constant 0 : index
    %c0_32 = arith.constant 0 : index
    %61 = vector.load %arg9[%c0_31, %c0_32] : memref<2x128xf32, #tpu.memory_space<vmem>>, vector<2x128xf32>
    tpu.vector_store %arg9[%c0_31, %c0_32], %60 {strides = array<i32>} : memref<2x128xf32, #tpu.memory_space<vmem>>, vector<2x128xf32>,
    return
  }
  func.func @transform_0(%arg0: i32) -> (i32, i32, i32) {
    %c0_i32 = arith.constant 0 : i32
    %c0_i32_0 = arith.constant 0 : i32
    %c0_i32_1 = arith.constant 0 : i32
    return %arg0, %c0_i32, %c0_i32_0 : i32, i32, i32
  }
  func.func @transform_1(%arg0: i32) -> (i32, i32, i32) {
    %c0_i32 = arith.constant 0 : i32
    %c0_i32_0 = arith.constant 0 : i32
    %c0_i32_1 = arith.constant 0 : i32
    return %arg0, %c0_i32, %c0_i32_0 : i32, i32, i32
  }
  func.func @transform_2(%arg0: i32) -> (i32, i32) {
    %c0_i32 = arith.constant 0 : i32
    %c0_i32_0 = arith.constant 0 : i32
    %c0_i32_1 = arith.constant 0 : i32
    return %c0_i32, %c0_i32_0 : i32, i32
  }
  func.func @transform_3(%arg0: i32) -> (i32, i32) {
    %c0_i32 = arith.constant 0 : i32
    %c0_i32_0 = arith.constant 0 : i32
    %c0_i32_1 = arith.constant 0 : i32
    return %c0_i32, %c0_i32_0 : i32, i32
  }
  func.func @transform_4(%arg0: i32) -> (i32, i32) {
    %c0_i32 = arith.constant 0 : i32
    %c0_i32_0 = arith.constant 0 : i32
    %c0_i32_1 = arith.constant 0 : i32
    return %c0_i32, %c0_i32_0 : i32, i32
  }
  func.func @transform_5(%arg0: i32) -> (i32, i32) {
    %c0_i32 = arith.constant 0 : i32
    %c0_i32_0 = arith.constant 0 : i32
    %c0_i32_1 = arith.constant 0 : i32
    return %c0_i32, %c0_i32_0 : i32, i32
  }
  func.func @transform_6(%arg0: i32) -> (i32, i32) {
    %c0_i32 = arith.constant 0 : i32
    %c0_i32_0 = arith.constant 0 : i32
    %c0_i32_1 = arith.constant 0 : i32
    return %c0_i32, %c0_i32_0 : i32, i32
  }
  func.func @transform_7(%arg0: i32) -> (i32, i32) {
    %c0_i32 = arith.constant 0 : i32
    %c0_i32_0 = arith.constant 0 : i32
    %c0_i32_1 = arith.constant 0 : i32
    return %c0_i32, %c0_i32_0 : i32, i32
  }
  func.func @transform_8(%arg0: i32) -> (i32, i32) {
    %c0_i32 = arith.constant 0 : i32
    %c0_i32_0 = arith.constant 0 : i32
    return %arg0, %c0_i32 : i32, i32
  }
}

</mosaic_0001>

<llo_original>
// kernel: tpu_custom_call.1
$region0: #{tpu_custom_call.1}
  #allocation0 [shape = 'u32[]', space=smem, size = 0x4, offset = 0x4, fixed_abs, tag = 'smem constant byte address 0x4 - core index']
  #allocation1 [shape = 'u32[72,128]{1,0:T(1,128)}', space=vmem, size = 0x9000, scoped, tag = 'internal scratch']
  %s0 = inlined_call_operand.hbm [shape: bf16[2,8,8], index: 0, kind: input, shape index: {}]
  %s1 = inlined_call_operand.hbm [shape: bf16[2,8,128], index: 1, kind: input, shape index: {}]
  %s2 = inlined_call_operand.hbm [shape: bf16[128,128], index: 2, kind: input, shape index: {}]
  %s3 = inlined_call_operand.vmem [shape: f32[1,128], index: 3, kind: input, shape index: {}]
  %s4 = inlined_call_operand.hbm [shape: bf16[128,128], index: 4, kind: input, shape index: {}]
  %s5 = inlined_call_operand.vmem [shape: f32[1,128], index: 5, kind: input, shape index: {}]
  %s6 = inlined_call_operand.hbm [shape: bf16[128,128], index: 6, kind: input, shape index: {}]
  %s7 = inlined_call_operand.vmem [shape: f32[1,128], index: 7, kind: input, shape index: {}]
  %s8 = inlined_call_operand.hbm [shape: f32[2,128], index: 8, kind: output, shape index: {}]
  %s9 = sld [smem:[#allocation0]]
  $region62: #{tpu_custom_call.1} parent=0
    _
  %s11 = ssub.s32 1, %s9
  %s12 = scalar_select 0, %s11, %s9
  $region1: #{tpu_custom_call.1} parent=0
    #allocation2 [shape = 'u8[4096]{0}', space=vmem, size = 0x1000, scoped, tag = 'input window, operand 0, single buffered']
    #allocation3 [shape = 's32[1]{0}', space=sflag, size = 0x4, scoped, tag = 'scoped memory for tpu_custom_call.1']
    #allocation4 [shape = 's32[1]{0}', space=sflag, size = 0x4, scoped, tag = 'scoped memory for tpu_custom_call.1']
    #allocation5 [shape = 'u8[4096]{0}', space=vmem, size = 0x1000, scoped, tag = 'input window, operand 1, single buffered']
    #allocation6 [shape = 's32[1]{0}', space=sflag, size = 0x4, scoped, tag = 'scoped memory for tpu_custom_call.1']
    #allocation7 [shape = 'u8[32768]{0}', space=vmem, size = 0x8000, scoped, tag = 'input window, operand 2, single buffered']
    #allocation8 [shape = 'u8[32768]{0}', space=vmem, size = 0x8000, scoped, tag = 'input window, operand 4, single buffered']
    #allocation9 [shape = 's32[1]{0}', space=sflag, size = 0x4, scoped, tag = 'scoped memory for tpu_custom_call.1']
    #allocation10 [shape = 'u8[32768]{0}', space=vmem, size = 0x8000, scoped, tag = 'input window, operand 6, single buffered']
    #allocation11 [shape = 'u8[1024]{0}', space=vmem, size = 0x400, scoped, tag = 'output window, operand 0, single buffered']
    %13 = vsyncpa [#allocation3], 0
    %14 = vsyncpa [#allocation6], 0
    %15 = vsyncpa [#allocation9], 0
    %16 = vsyncpa [#allocation4], 0
    // Predicated region
    $region2: #{tpu_custom_call.1} parent=1 // pred_check
      _
    $region3: #{tpu_custom_call.1} parent=1 // pred_check_branch
      %18 = sbr.rel (0) target = $region5
    $region4: #{tpu_custom_call.1} parent=1 // pred_region
      %20 = vsyncadd [#allocation3], 0
      %s21 = sshll.u32 %s0, 4
      %s22 = int_to_ptr.hbm [resolvable:$true] %s21
      %s23 = sshll.u32 [#allocation2], 4
      %s24 = int_to_ptr.vmem [resolvable:$true] %s23
      %29 = dma.hbm_to_vmem [thread:$0]  %s22, 128, %s24, [#allocation3], 64, 64, 4
    $region5: #{tpu_custom_call.1} parent=1 // pred_fallthru
      _
    // Predicated region
    $region6: #{tpu_custom_call.1} parent=1 // pred_check
      _
    $region7: #{tpu_custom_call.1} parent=1 // pred_check_branch
      %31 = sbr.rel (0) target = $region9
    $region8: #{tpu_custom_call.1} parent=1 // pred_region
      %33 = vsyncadd [#allocation6], 0
      %s34 = sshll.u32 %s1, 4
      %s35 = int_to_ptr.hbm [resolvable:$true] %s34
      %s36 = sshll.u32 [#allocation5], 4
      %s37 = int_to_ptr.vmem [resolvable:$true] %s36
      %42 = dma.hbm_to_vmem [thread:$0]  %s35, 128, %s37, [#allocation6], 64, 64, 4
    $region9: #{tpu_custom_call.1} parent=1 // pred_fallthru
      _
    // Predicated region
    $region10: #{tpu_custom_call.1} parent=1 // pred_check
      _
    $region11: #{tpu_custom_call.1} parent=1 // pred_check_branch
      %44 = sbr.rel (0) target = $region13
    $region12: #{tpu_custom_call.1} parent=1 // pred_region
      %46 = vsyncadd [#allocation6], 0
      %s47 = sshll.u32 %s2, 4
      %s48 = int_to_ptr.hbm [resolvable:$true] %s47
      %s49 = sshll.u32 [#allocation7], 4
      %s50 = int_to_ptr.vmem [resolvable:$true] %s49
      %55 = dma.hbm_to_vmem [thread:$0]  %s48, 1024, %s50, [#allocation6], 64, 64, 4
    $region13: #{tpu_custom_call.1} parent=1 // pred_fallthru
      _
    // Predicated region
    $region14: #{tpu_custom_call.1} parent=1 // pred_check
      _
    $region15: #{tpu_custom_call.1} parent=1 // pred_check_branch
      %57 = sbr.rel (0) target = $region17
    $region16: #{tpu_custom_call.1} parent=1 // pred_region
      _
    $region17: #{tpu_custom_call.1} parent=1 // pred_fallthru
      _
    // Predicated region
    $region18: #{tpu_custom_call.1} parent=1 // pred_check
      _
    $region19: #{tpu_custom_call.1} parent=1 // pred_check_branch
      %59 = sbr.rel (0) target = $region21
    $region20: #{tpu_custom_call.1} parent=1 // pred_region
      %61 = vsyncadd [#allocation9], 0
      %s62 = sshll.u32 %s4, 4
      %s63 = int_to_ptr.hbm [resolvable:$true] %s62
      %s64 = sshll.u32 [#allocation8], 4
      %s65 = int_to_ptr.vmem [resolvable:$true] %s64
      %70 = dma.hbm_to_vmem [thread:$0]  %s63, 1024, %s65, [#allocation9], 64, 64, 4
    $region21: #{tpu_custom_call.1} parent=1 // pred_fallthru
      _
    // Predicated region
    $region22: #{tpu_custom_call.1} parent=1 // pred_check
      _
    $region23: #{tpu_custom_call.1} parent=1 // pred_check_branch
      %72 = sbr.rel (0) target = $region25
    $region24: #{tpu_custom_call.1} parent=1 // pred_region
      _
    $region25: #{tpu_custom_call.1} parent=1 // pred_fallthru
      _
    // Predicated region
    $region26: #{tpu_custom_call.1} parent=1 // pred_check
      _
    $region27: #{tpu_custom_call.1} parent=1 // pred_check_branch
      %74 = sbr.rel (0) target = $region29
    $region28: #{tpu_custom_call.1} parent=1 // pred_region
      %76 = vsyncadd [#allocation9], 0
      %s77 = sshll.u32 %s6, 4
      %s78 = int_to_ptr.hbm [resolvable:$true] %s77
      %s79 = sshll.u32 [#allocation10], 4
      %s80 = int_to_ptr.vmem [resolvable:$true] %s79
      %85 = dma.hbm_to_vmem [thread:$0]  %s78, 1024, %s80, [#allocation9], 64, 64, 4
    $region29: #{tpu_custom_call.1} parent=1 // pred_fallthru
      _
    // Predicated region
    $region30: #{tpu_custom_call.1} parent=1 // pred_check
      _
    $region31: #{tpu_custom_call.1} parent=1 // pred_check_branch
      %87 = sbr.rel (0) target = $region33
    $region32: #{tpu_custom_call.1} parent=1 // pred_region
      _
    $region33: #{tpu_custom_call.1} parent=1 // pred_fallthru
      _
    // Predicated region
    $region34: #{tpu_custom_call.1} parent=1 // pred_check
      _
    $region35: #{tpu_custom_call.1} parent=1 // pred_check_branch
      %89 = sbr.rel (0) target = $region37
    $region36: #{tpu_custom_call.1} parent=1 // pred_region
      %91 = dma.done [#allocation3], 128
    $region37: #{tpu_custom_call.1} parent=1 // pred_fallthru
      _
    // Predicated region
    $region38: #{tpu_custom_call.1} parent=1 // pred_check
      _
    $region39: #{tpu_custom_call.1} parent=1 // pred_check_branch
      %93 = sbr.rel (0) target = $region41
    $region40: #{tpu_custom_call.1} parent=1 // pred_region
      %95 = dma.done [#allocation6], 128
    $region41: #{tpu_custom_call.1} parent=1 // pred_fallthru
      _
    // Predicated region
    $region42: #{tpu_custom_call.1} parent=1 // pred_check
      _
    $region43: #{tpu_custom_call.1} parent=1 // pred_check_branch
      %97 = sbr.rel (0) target = $region45
    $region44: #{tpu_custom_call.1} parent=1 // pred_region
      %99 = dma.done [#allocation6], 1024
    $region45: #{tpu_custom_call.1} parent=1 // pred_fallthru
      _
    // Predicated region
    $region46: #{tpu_custom_call.1} parent=1 // pred_check
      _
    $region47: #{tpu_custom_call.1} parent=1 // pred_check_branch
      %101 = sbr.rel (0) target = $region49
    $region48: #{tpu_custom_call.1} parent=1 // pred_region
      %103 = dma.done [#allocation9], 1024
    $region49: #{tpu_custom_call.1} parent=1 // pred_fallthru
      _
    // Predicated region
    $region50: #{tpu_custom_call.1} parent=1 // pred_check
      _
    $region51: #{tpu_custom_call.1} parent=1 // pred_check_branch
      %105 = sbr.rel (0) target = $region53
    $region52: #{tpu_custom_call.1} parent=1 // pred_region
      %107 = dma.done [#allocation9], 1024
    $region53: #{tpu_custom_call.1} parent=1 // pred_fallthru
      _
    %v109 = vld [vmem:[#allocation2] sm:$0xf]
    %v110 = vld [vmem:[#allocation2 + $0x4] sm:$0xf]
    %v111 = vunpack.c.l.bf16 %v109
    %v112 = vunpack.c.l.bf16 %v110
    %vm113 = vcmask 64512
    %v114 = vsel %vm113, %v111, 0.0
    %115 = vadd.xlane.f32.xlu0 %v114
    %v116 = vpop.xlane.xlu0 %115
    %v117 = vsel %vm113, %v112, 0.0
    %118 = vadd.xlane.f32.xlu0 %v117
    %v119 = vpop.xlane.xlu0 %118
    %v120 = vrot.slane %v114, 4
    %v121 = vadd.f32 %v114, %v120
    %v122 = vrot.slane %v121, 2
    %v123 = vadd.f32 %v121, %v122
    %v124 = vrot.slane %v123, 1
    %v125 = vadd.f32 %v123, %v124
    %v126 = vrot.slane %v117, 4
    %v127 = vadd.f32 %v117, %v126
    %v128 = vrot.slane %v127, 2
    %v129 = vadd.f32 %v127, %v128
    %v130 = vrot.slane %v129, 1
    %v131 = vadd.f32 %v129, %v130
    %v132 = vmax.f32 %v116, 1.0
    %v133 = vmax.f32 %v119, 1.0
    %v134 = vrsqrt.pop %v132
    %v135 = vmul.f32 %v134, %v132
    %v136 = vmul.f32 %v135, %v134
    %v137 = vmul.f32 0.5, %v136
    %v138 = vsub.f32 1.5, %v137
    %v139 = vmul.f32 %v134, %v138
    %vm140 = vweird.f32 %v132
    %vm141 = vweird.f32 %v134
    %vm142 = vmor %vm140, %vm141
    %v143 = vsel %vm142, %v134, %v139
    %v144 = vrsqrt.pop %v133
    %v145 = vmul.f32 %v144, %v133
    %v146 = vmul.f32 %v145, %v144
    %v147 = vmul.f32 0.5, %v146
    %v148 = vsub.f32 1.5, %v147
    %v149 = vmul.f32 %v144, %v148
    %vm150 = vweird.f32 %v133
    %vm151 = vweird.f32 %v144
    %vm152 = vmor %vm150, %vm151
    %v153 = vsel %vm152, %v144, %v149
    %v154 = vmax.f32 %v125, 1.0
    %v155 = vmax.f32 %v131, 1.0
    %v156 = vrsqrt.pop %v154
    %v157 = vmul.f32 %v156, %v154
    %v158 = vmul.f32 %v157, %v156
    %v159 = vmul.f32 0.5, %v158
    %v160 = vsub.f32 1.5, %v159
    %v161 = vmul.f32 %v156, %v160
    %vm162 = vweird.f32 %v154
    %vm163 = vweird.f32 %v156
    %vm164 = vmor %vm162, %vm163
    %v165 = vsel %vm164, %v156, %v161
    %v166 = vrsqrt.pop %v155
    %v167 = vmul.f32 %v166, %v155
    %v168 = vmul.f32 %v167, %v166
    %v169 = vmul.f32 0.5, %v168
    %v170 = vsub.f32 1.5, %v169
    %v171 = vmul.f32 %v166, %v170
    %vm172 = vweird.f32 %v155
    %vm173 = vweird.f32 %v166
    %vm174 = vmor %vm172, %vm173
    %v175 = vsel %vm174, %v166, %v171
    %v176 = vmul.f32 %v111, %v143
    %v177 = vmul.f32 %v112, %v153
    %v178 = vmul.f32 %v176, %v165
    %v179 = vmul.f32 %v177, %v175
    %v180 = vpack.c.bf16 %v178, %v178
    %v181 = vpack.c.bf16 %v179, %v179
    %v182 = vld [vmem:[#allocation5] sm:$0xf]
    %v183 = vld [vmem:[#allocation5 + $0x4] sm:$0xf]
    %v184 = vld [vmem:[#allocation7] sm:$0xf]
    %v185 = vld [vmem:[#allocation7 + $0x4] sm:$0xf]
    %v186 = vld [vmem:[#allocation7 + $0x8] sm:$0xf]
    %v187 = vld [vmem:[#allocation7 + $0xc] sm:$0xf]
    %v188 = vld [vmem:[#allocation7 + $0x10] sm:$0xf]
    %v189 = vld [vmem:[#allocation7 + $0x14] sm:$0xf]
    %v190 = vld [vmem:[#allocation7 + $0x18] sm:$0xf]
    %v191 = vld [vmem:[#allocation7 + $0x1c] sm:$0xf]
    %v192 = vld [vmem:[#allocation7 + $0x20] sm:$0xf]
    %v193 = vld [vmem:[#allocation7 + $0x24] sm:$0xf]
    %v194 = vld [vmem:[#allocation7 + $0x28] sm:$0xf]
    %v195 = vld [vmem:[#allocation7 + $0x2c] sm:$0xf]
    %v196 = vld [vmem:[#allocation7 + $0x30] sm:$0xf]
    %v197 = vld [vmem:[#allocation7 + $0x34] sm:$0xf]
    %v198 = vld [vmem:[#allocation7 + $0x38] sm:$0xf]
    %v199 = vld [vmem:[#allocation7 + $0x3c] sm:$0xf]
    %v202 = vunpack.c.l.b16 %v182
    %v203 = vunpack.c.l.b16 %v183
    %v204 = vpack.c.b16 %v203, %v202
    %v222 = vunpack.c.l.b16 %v184
    %v223 = vunpack.c.l.b16 %v185
    %v224 = vunpack.c.l.b16 %v186
    %v225 = vunpack.c.l.b16 %v187
    %v226 = vunpack.c.l.b16 %v188
    %v227 = vunpack.c.l.b16 %v189
    %v228 = vunpack.c.l.b16 %v190
    %v229 = vunpack.c.l.b16 %v191
    %v230 = vunpack.c.l.b16 %v192
    %v231 = vunpack.c.l.b16 %v193
    %v232 = vunpack.c.l.b16 %v194
    %v233 = vunpack.c.l.b16 %v195
    %v234 = vunpack.c.l.b16 %v196
    %v235 = vunpack.c.l.b16 %v197
    %v236 = vunpack.c.l.b16 %v198
    %v237 = vunpack.c.l.b16 %v199
    %v238 = vpack.c.b16 %v223, %v222
    %v239 = vpack.c.b16 %v225, %v224
    %v240 = vpack.c.b16 %v227, %v226
    %v241 = vpack.c.b16 %v229, %v228
    %v242 = vpack.c.b16 %v231, %v230
    %v243 = vpack.c.b16 %v233, %v232
    %v244 = vpack.c.b16 %v235, %v234
    %v245 = vpack.c.b16 %v237, %v236
    %254 = vmatpush.bf16.msra.mxu0 %v245
    %255 = vmatpush.bf16.msra.mxu0 %v244
    %256 = vmatpush.bf16.msra.mxu0 %v243
    %257 = vmatpush.bf16.msra.mxu0 %v242
    %258 = vmatpush.bf16.msra.mxu0 %v241
    %259 = vmatpush.bf16.msra.mxu0 %v240
    %260 = vmatpush.bf16.msra.mxu0 %v239
    %261 = vmatpush.bf16.msra.mxu0 %v238
    %262 = vmatmul.bf16.gmra.mxu0 %v204
    %v263 = vpop.f32.mrf.mxu0
    %v264 = vadd.f32 0.0, %v263
    %v265 = vpop.f32.mrf.mxu0
    %v266 = vadd.f32 0.0, %v265
    %267 = vdwg.mxu0
    %v268 = vpack.c.bf16 %v264, %v264
    %v269 = vpack.c.bf16 %v266, %v266
    %v270 = vld [vmem:[%s3] sm:$0x1]
    %v272 = vperm.slane %v270, 0
    %v275 = vsel %vm113, %v180, 0
    %vm277 = vcmask 1043456
    %v279 = vsel %vm277, %v268, 0
    %281 = vmatpush.bf16.msra.mxu0 0
    %282 = vmatpush.bf16.msra.mxu0 0
    %283 = vmatpush.bf16.msra.mxu0 0
    %284 = vmatpush.bf16.msra.mxu0 0
    %285 = vmatpush.bf16.msra.mxu0 0
    %286 = vmatpush.bf16.msra.mxu0 0
    %287 = vmatpush.bf16.msra.mxu0 0
    %288 = vmatpush.bf16.msra.mxu0 %v279
    %289 = vmatmul.bf16.gmra.mxu0 %v275
    %v290 = vpop.f32.mrf.mxu0
    %v291 = vadd.f32 %v272, %v290
    %v292 = vpop.f32.mrf.mxu0
    %293 = vdwg.mxu0
    %v295 = vsel %vm113, %v181, 0
    %v298 = vsel %vm277, %v269, 0
    %300 = vmatpush.bf16.msra.mxu0 0
    %301 = vmatpush.bf16.msra.mxu0 0
    %302 = vmatpush.bf16.msra.mxu0 0
    %303 = vmatpush.bf16.msra.mxu0 0
    %304 = vmatpush.bf16.msra.mxu0 0
    %305 = vmatpush.bf16.msra.mxu0 0
    %306 = vmatpush.bf16.msra.mxu0 0
    %307 = vmatpush.bf16.msra.mxu0 %v298
    %308 = vmatmul.bf16.gmra.mxu0 %v295
    %v309 = vpop.f32.mrf.mxu0
    %v310 = vadd.f32 %v272, %v309
    %v311 = vpop.f32.mrf.mxu0
    %312 = vdwg.mxu0
    %v313 = vmax.f32 %v291, 0.0
    %v314 = vmax.f32 %v310, 0.0
    %v315 = vpack.c.bf16 %v313, %v313
    %v316 = vpack.c.bf16 %v314, %v314
    %v317 = vld [vmem:[#allocation8] sm:$0xf]
    %v318 = vld [vmem:[#allocation8 + $0x4] sm:$0xf]
    %v319 = vld [vmem:[#allocation8 + $0x8] sm:$0xf]
    %v320 = vld [vmem:[#allocation8 + $0xc] sm:$0xf]
    %v321 = vld [vmem:[#allocation8 + $0x10] sm:$0xf]
    %v322 = vld [vmem:[#allocation8 + $0x14] sm:$0xf]
    %v323 = vld [vmem:[#allocation8 + $0x18] sm:$0xf]
    %v324 = vld [vmem:[#allocation8 + $0x1c] sm:$0xf]
    %v325 = vld [vmem:[#allocation8 + $0x20] sm:$0xf]
    %v326 = vld [vmem:[#allocation8 + $0x24] sm:$0xf]
    %v327 = vld [vmem:[#allocation8 + $0x28] sm:$0xf]
    %v328 = vld [vmem:[#allocation8 + $0x2c] sm:$0xf]
    %v329 = vld [vmem:[#allocation8 + $0x30] sm:$0xf]
    %v330 = vld [vmem:[#allocation8 + $0x34] sm:$0xf]
    %v331 = vld [vmem:[#allocation8 + $0x38] sm:$0xf]
    %v332 = vld [vmem:[#allocation8 + $0x3c] sm:$0xf]
    %v335 = vunpack.c.l.b16 %v315
    %v336 = vunpack.c.l.b16 %v316
    %v337 = vpack.c.b16 %v336, %v335
    %v355 = vunpack.c.l.b16 %v317
    %v356 = vunpack.c.l.b16 %v318
    %v357 = vunpack.c.l.b16 %v319
    %v358 = vunpack.c.l.b16 %v320
    %v359 = vunpack.c.l.b16 %v321
    %v360 = vunpack.c.l.b16 %v322
    %v361 = vunpack.c.l.b16 %v323
    %v362 = vunpack.c.l.b16 %v324
    %v363 = vunpack.c.l.b16 %v325
    %v364 = vunpack.c.l.b16 %v326
    %v365 = vunpack.c.l.b16 %v327
    %v366 = vunpack.c.l.b16 %v328
    %v367 = vunpack.c.l.b16 %v329
    %v368 = vunpack.c.l.b16 %v330
    %v369 = vunpack.c.l.b16 %v331
    %v370 = vunpack.c.l.b16 %v332
    %v371 = vpack.c.b16 %v356, %v355
    %v372 = vpack.c.b16 %v358, %v357
    %v373 = vpack.c.b16 %v360, %v359
    %v374 = vpack.c.b16 %v362, %v361
    %v375 = vpack.c.b16 %v364, %v363
    %v376 = vpack.c.b16 %v366, %v365
    %v377 = vpack.c.b16 %v368, %v367
    %v378 = vpack.c.b16 %v370, %v369
    %387 = vmatpush.bf16.msra.mxu0 %v378
    %388 = vmatpush.bf16.msra.mxu0 %v377
    %389 = vmatpush.bf16.msra.mxu0 %v376
    %390 = vmatpush.bf16.msra.mxu0 %v375
    %391 = vmatpush.bf16.msra.mxu0 %v374
    %392 = vmatpush.bf16.msra.mxu0 %v373
    %393 = vmatpush.bf16.msra.mxu0 %v372
    %394 = vmatpush.bf16.msra.mxu0 %v371
    %395 = vmatmul.bf16.gmra.mxu0 %v337
    %v396 = vpop.f32.mrf.mxu0
    %v397 = vadd.f32 0.0, %v396
    %v398 = vpop.f32.mrf.mxu0
    %v399 = vadd.f32 0.0, %v398
    %400 = vdwg.mxu0
    %v401 = vpack.c.bf16 %v397, %v397
    %v402 = vpack.c.bf16 %v399, %v399
    %v403 = vld [vmem:[%s5] sm:$0x1]
    %v405 = vperm.slane %v403, 0
    %v408 = vsel %vm277, %v401, 0
    %410 = vmatpush.bf16.msra.mxu0 0
    %411 = vmatpush.bf16.msra.mxu0 0
    %412 = vmatpush.bf16.msra.mxu0 0
    %413 = vmatpush.bf16.msra.mxu0 0
    %414 = vmatpush.bf16.msra.mxu0 0
    %415 = vmatpush.bf16.msra.mxu0 0
    %416 = vmatpush.bf16.msra.mxu0 0
    %417 = vmatpush.bf16.msra.mxu0 %v408
    %418 = vmatmul.bf16.gmra.mxu0 %v275
    %v419 = vpop.f32.mrf.mxu0
    %v420 = vadd.f32 %v405, %v419
    %v421 = vpop.f32.mrf.mxu0
    %422 = vdwg.mxu0
    %v424 = vsel %vm277, %v402, 0
    %426 = vmatpush.bf16.msra.mxu0 0
    %427 = vmatpush.bf16.msra.mxu0 0
    %428 = vmatpush.bf16.msra.mxu0 0
    %429 = vmatpush.bf16.msra.mxu0 0
    %430 = vmatpush.bf16.msra.mxu0 0
    %431 = vmatpush.bf16.msra.mxu0 0
    %432 = vmatpush.bf16.msra.mxu0 0
    %433 = vmatpush.bf16.msra.mxu0 %v424
    %434 = vmatmul.bf16.gmra.mxu0 %v295
    %v435 = vpop.f32.mrf.mxu0
    %v436 = vadd.f32 %v405, %v435
    %v437 = vpop.f32.mrf.mxu0
    %438 = vdwg.mxu0
    %v439 = vmax.f32 %v420, 0.0
    %v440 = vmax.f32 %v436, 0.0
    %v441 = vpack.c.bf16 %v439, %v439
    %v442 = vpack.c.bf16 %v440, %v440
    %v443 = vld [vmem:[#allocation10] sm:$0xf]
    %v444 = vld [vmem:[#allocation10 + $0x4] sm:$0xf]
    %v445 = vld [vmem:[#allocation10 + $0x8] sm:$0xf]
    %v446 = vld [vmem:[#allocation10 + $0xc] sm:$0xf]
    %v447 = vld [vmem:[#allocation10 + $0x10] sm:$0xf]
    %v448 = vld [vmem:[#allocation10 + $0x14] sm:$0xf]
    %v449 = vld [vmem:[#allocation10 + $0x18] sm:$0xf]
    %v450 = vld [vmem:[#allocation10 + $0x1c] sm:$0xf]
    %v451 = vld [vmem:[#allocation10 + $0x20] sm:$0xf]
    %v452 = vld [vmem:[#allocation10 + $0x24] sm:$0xf]
    %v453 = vld [vmem:[#allocation10 + $0x28] sm:$0xf]
    %v454 = vld [vmem:[#allocation10 + $0x2c] sm:$0xf]
    %v455 = vld [vmem:[#allocation10 + $0x30] sm:$0xf]
    %v456 = vld [vmem:[#allocation10 + $0x34] sm:$0xf]
    %v457 = vld [vmem:[#allocation10 + $0x38] sm:$0xf]
    %v458 = vld [vmem:[#allocation10 + $0x3c] sm:$0xf]
    %v461 = vunpack.c.l.b16 %v441
    %v462 = vunpack.c.l.b16 %v442
    %v463 = vpack.c.b16 %v462, %v461
    %v481 = vunpack.c.l.b16 %v443
    %v482 = vunpack.c.l.b16 %v444
    %v483 = vunpack.c.l.b16 %v445
    %v484 = vunpack.c.l.b16 %v446
    %v485 = vunpack.c.l.b16 %v447
    %v486 = vunpack.c.l.b16 %v448
    %v487 = vunpack.c.l.b16 %v449
    %v488 = vunpack.c.l.b16 %v450
    %v489 = vunpack.c.l.b16 %v451
    %v490 = vunpack.c.l.b16 %v452
    %v491 = vunpack.c.l.b16 %v453
    %v492 = vunpack.c.l.b16 %v454
    %v493 = vunpack.c.l.b16 %v455
    %v494 = vunpack.c.l.b16 %v456
    %v495 = vunpack.c.l.b16 %v457
    %v496 = vunpack.c.l.b16 %v458
    %v497 = vpack.c.b16 %v482, %v481
    %v498 = vpack.c.b16 %v484, %v483
    %v499 = vpack.c.b16 %v486, %v485
    %v500 = vpack.c.b16 %v488, %v487
    %v501 = vpack.c.b16 %v490, %v489
    %v502 = vpack.c.b16 %v492, %v491
    %v503 = vpack.c.b16 %v494, %v493
    %v504 = vpack.c.b16 %v496, %v495
    %513 = vmatpush.bf16.msra.mxu0 %v504
    %514 = vmatpush.bf16.msra.mxu0 %v503
    %515 = vmatpush.bf16.msra.mxu0 %v502
    %516 = vmatpush.bf16.msra.mxu0 %v501
    %517 = vmatpush.bf16.msra.mxu0 %v500
    %518 = vmatpush.bf16.msra.mxu0 %v499
    %519 = vmatpush.bf16.msra.mxu0 %v498
    %520 = vmatpush.bf16.msra.mxu0 %v497
    %521 = vmatmul.bf16.gmra.mxu0 %v463
    %v522 = vpop.f32.mrf.mxu0
    %v523 = vadd.f32 0.0, %v522
    %v524 = vpop.f32.mrf.mxu0
    %v525 = vadd.f32 0.0, %v524
    %526 = vdwg.mxu0
    %v527 = vpack.c.bf16 %v523, %v523
    %v528 = vpack.c.bf16 %v525, %v525
    %v529 = vld [vmem:[%s7] sm:$0x1]
    %v531 = vperm.slane %v529, 0
    %v534 = vsel %vm277, %v527, 0
    %536 = vmatpush.bf16.msra.mxu0 0
    %537 = vmatpush.bf16.msra.mxu0 0
    %538 = vmatpush.bf16.msra.mxu0 0
    %539 = vmatpush.bf16.msra.mxu0 0
    %540 = vmatpush.bf16.msra.mxu0 0
    %541 = vmatpush.bf16.msra.mxu0 0
    %542 = vmatpush.bf16.msra.mxu0 0
    %543 = vmatpush.bf16.msra.mxu0 %v534
    %544 = vmatmul.bf16.gmra.mxu0 %v275
    %v545 = vpop.f32.mrf.mxu0
    %v546 = vadd.f32 %v531, %v545
    %v547 = vpop.f32.mrf.mxu0
    %548 = vdwg.mxu0
    %v550 = vsel %vm277, %v528, 0
    %552 = vmatpush.bf16.msra.mxu0 0
    %553 = vmatpush.bf16.msra.mxu0 0
    %554 = vmatpush.bf16.msra.mxu0 0
    %555 = vmatpush.bf16.msra.mxu0 0
    %556 = vmatpush.bf16.msra.mxu0 0
    %557 = vmatpush.bf16.msra.mxu0 0
    %558 = vmatpush.bf16.msra.mxu0 0
    %559 = vmatpush.bf16.msra.mxu0 %v550
    %560 = vmatmul.bf16.gmra.mxu0 %v295
    %v561 = vpop.f32.mrf.mxu0
    %v562 = vadd.f32 %v531, %v561
    %v563 = vpop.f32.mrf.mxu0
    %564 = vdwg.mxu0
    %v565 = vmax.f32 %v546, 0.0
    %v566 = vmax.f32 %v562, 0.0
    %v567 = vrot.slane %v565, 4
    %v568 = vadd.f32 %v565, %v567
    %v569 = vrot.slane %v568, 2
    %v570 = vadd.f32 %v568, %v569
    %v571 = vrot.slane %v570, 1
    %v572 = vadd.f32 %v570, %v571
    %v573 = vrot.slane %v566, 4
    %v574 = vadd.f32 %v566, %v573
    %v575 = vrot.slane %v574, 2
    %v576 = vadd.f32 %v574, %v575
    %v577 = vrot.slane %v576, 1
    %v578 = vadd.f32 %v576, %v577
    %v579 = vrcp.pop 8.0
    %v580 = vmul.f32 8.0, %v579
    %v581 = vsub.f32 1.0, %v580
    %v582 = vmul.f32 %v579, %v581
    %v583 = vadd.f32 %v579, %v582
    %vm584 = vweird.f32 %v579
    %v585 = vsel %vm584, %v579, %v583
    %v586 = vmul.f32 %v572, %v585
    %v587 = vmul.f32 %v578, %v585
    %vm590 = vcmask 1041409
    %v591 = vsel %vm590, %v587, %v586
    %593 = vst [vmem:[#allocation11] sm:$0x3] %v591
    // Predicated region
    $region54: #{tpu_custom_call.1} parent=1 // pred_check
      _
    $region55: #{tpu_custom_call.1} parent=1 // pred_check_branch
      %595 = sbr.rel (0) target = $region57
    $region56: #{tpu_custom_call.1} parent=1 // pred_region
      %597 = vsyncadd [#allocation4], 0
      %s599 = sshll.u32 [#allocation11], 4
      %s600 = int_to_ptr.vmem [resolvable:$true] %s599
      %s601 = sshll.u32 %s8, 4
      %s602 = int_to_ptr.hbm [resolvable:$true] %s601
      %604 = dma.vmem_to_hbm [thread:$0]  %s600, 32, %s602, [#allocation4]
    $region57: #{tpu_custom_call.1} parent=1 // pred_fallthru
      _
    // Predicated region
    $region58: #{tpu_custom_call.1} parent=1 // pred_check
      _
    $region59: #{tpu_custom_call.1} parent=1 // pred_check_branch
      %606 = sbr.rel (0) target = $region61
    $region60: #{tpu_custom_call.1} parent=1 // pred_region
      %608 = dma.done [#allocation4], 32
    $region61: #{tpu_custom_call.1} parent=1 // pred_fallthru
      _
    %609 = vsyncpa [#allocation3], 1
    %610 = vsyncpa [#allocation6], 1
    %611 = vsyncpa [#allocation9], 1
    %612 = vsyncpa [#allocation4], 1

</llo_original>
